<compile_context>
chip_gen: v7x
topology: tpu7x:2x2x1
jax: 0.10.0
libtpu: 0.0.40
codegen_flags: <defaults>
</compile_context>

<pallas_src>
import jax
import jax.numpy as jnp
from jax.experimental import pallas as pl
from jax.experimental.pallas import tpu as pltpu


def _round_up(x, m):
    return (x + m - 1) // m * m


def _critic_kernel(s_ref, a_ref,
                   w1_ref, b1_ref,
                   w2s_ref, w2a_ref, b2_ref,
                   w3_ref, b3_ref,
                   out_ref):
    cdt = w1_ref.dtype  # MXU input dtype (bf16); accumulation stays f32.

    # Layer 1: relu(s @ W1 + b1)                      (TB, Ns) -> (TB, H1P)
    h1 = jnp.dot(s_ref[...].astype(cdt), w1_ref[...],
                 preferred_element_type=jnp.float32)
    # Materialize the big intermediate in bf16: halves vst/vld traffic for the
    # (TB, 512) tensor streaming through VMEM (store slot is first to saturate
    # on v5e; frees ld/st slots + scratch on v6e/v7x).
    h1 = jnp.maximum(h1 + b1_ref[...], 0.0).astype(cdt)

    # Layer 2 with implicit concat:
    #   relu([h1, a] @ W2 + b2) == relu(h1 @ W2[:H1] + a @ W2[H1:] + b2)
    h2 = jnp.dot(h1, w2s_ref[...], preferred_element_type=jnp.float32)
    h2 = h2 + jnp.dot(a_ref[...].astype(cdt), w2a_ref[...],
                      preferred_element_type=jnp.float32)
    h2 = jnp.maximum(h2 + b2_ref[...], 0.0)

    # Layer 3: q = h2 @ W3 + b3 as VPU multiply + XLU lane reduction
    # (avoids a degenerate N=1 MXU matmul; padded lanes of h2/W3 are zero).
    q = jnp.sum(h2 * w3_ref[...], axis=-1)            # (TB,)
    # Lane-dense output block (1, 1, TB): unmasked vst instead of (TB, 1)
    # masked 1-lane stores.
    out_ref[...] = q.reshape(1, 1, -1) + b3_ref[...]


def prepare_critic_params(params, compute_dtype=jnp.bfloat16):
    """One-time weight prep: transpose, split concat, zero-pad to lane multiples, cast."""
    w1, b1, w2, b2, w3, b3 = (params[k] for k in ("w1", "b1", "w2", "b2", "w3", "b3"))
    H1, Ns = w1.shape                 # (400, Ns) PyTorch (out, in) layout
    H2 = w2.shape[0]                  # 300
    Na = w2.shape[1] - H1             # concat split derived, not hard-coded
    H1P = _round_up(H1, 128)          # 400 -> 512
    H2P = _round_up(H2, 128)          # 300 -> 384

    w1t = w1.T                        # (Ns, H1)
    w2t = w2.T                        # (H1+Na, H2)

    w1p = jnp.zeros((Ns, H1P), jnp.float32).at[:, :H1].set(w1t).astype(compute_dtype)
    b1p = jnp.zeros((1, H1P), jnp.float32).at[:, :H1].set(b1)

    w2sp = jnp.zeros((H1P, H2P), jnp.float32).at[:H1, :H2].set(w2t[:H1]).astype(compute_dtype)
    w2ap = jnp.zeros((Na, H2P), jnp.float32).at[:, :H2].set(w2t[H1:]).astype(compute_dtype)
    b2p = jnp.zeros((1, H2P), jnp.float32).at[:, :H2].set(b2)

    # W3 kept in f32 as a lane-dense row for the VPU reduction.
    w3row = jnp.zeros((1, H2P), jnp.float32).at[:, :H2].set(w3.reshape(1, H2))
    b3p = b3.reshape(1, 1).astype(jnp.float32)

    return {"w1": w1p, "b1": b1p, "w2s": w2sp, "w2a": w2ap, "b2": b2p,
            "w3": w3row, "b3": b3p}


def critic_forward(s, a, prep, *, batch_tile=1024):
    """s: (B, Ns) f32, a: (B, Na) f32, prep: prepare_critic_params output -> (B, 1) f32."""
    B, Ns = s.shape
    Na = a.shape[1]

    w1, b1, w2s, w2a, b2, w3, b3 = (prep[k] for k in
                                    ("w1", "b1", "w2s", "w2a", "b2", "w3", "b3"))
    H1P = w1.shape[1]
    H2P = w2s.shape[1]

    # ---- batch tile selection ----
    TB = min(batch_tile, B)
    if B >= 256:
        # v7x megacore: keep >= 2 grid steps so the "parallel" batch axis can
        # be sharded across both TensorCores. Duplicated weight DMA is ~0.8 MB.
        TB = min(TB, _round_up(-(-B // 2), 8))
    TB = max(8, _round_up(TB, 8))

    pad = (-B) % TB
    if pad:
        s = jnp.pad(s, ((0, pad), (0, 0)))
        a = jnp.pad(a, ((0, pad), (0, 0)))
    Bp = B + pad
    num_tiles = Bp // TB
    grid = (num_tiles,)

    def batch_spec(feat):
        return pl.BlockSpec((TB, feat), lambda i: (i, 0))

    def invariant_spec(arr):
        # Block-invariant, single-buffered: fetched once, stays VMEM-resident.
        return pl.BlockSpec(arr.shape, lambda i: (0, 0),
                            pipeline_mode=pl.Buffered(1))

    weight_bytes = sum(int(x.size) * x.dtype.itemsize
                       for x in (w1, b1, w2s, w2a, b2, w3, b3))
    cost = pl.CostEstimate(
        flops=2 * Bp * (Ns * H1P + H1P * H2P + Na * H2P + H2P),
        transcendentals=0,
        bytes_accessed=4 * Bp * (Ns + Na + 1) + weight_bytes,
    )

    q_tiles = pl.pallas_call(
        _critic_kernel,
        out_shape=jax.ShapeDtypeStruct((num_tiles, 1, TB), jnp.float32),
        grid=grid,
        in_specs=[
            batch_spec(Ns),                  # s  tile
            batch_spec(Na),                  # a  tile
            invariant_spec(w1),              # W1 (VMEM-resident across grid)
            invariant_spec(b1),
            invariant_spec(w2s),
            invariant_spec(w2a),
            invariant_spec(b2),
            invariant_spec(w3),
            invariant_spec(b3),
        ],
        out_specs=pl.BlockSpec((1, 1, TB), lambda i: (i, 0, 0)),
        compiler_params=pltpu.CompilerParams(
            dimension_semantics=("parallel",)),
        cost_estimate=cost,
    )(s, a, w1, b1, w2s, w2a, b2, w3, b3)

    # (num_tiles, 1, TB) row-major == batch order; back to (B, 1).
    q = q_tiles.reshape(Bp, 1)
    return q[:B] if pad else q


def init_critic_params(key, Ns, Na):
    """Deterministic init mimicking PyTorch's default Linear init (U(-1/sqrt(fan_in), +))."""
    ks = jax.random.split(key, 6)

    def lin(kw, kb, fan_in, fan_out):
        bound = 1.0 / jnp.sqrt(jnp.float32(fan_in))
        w = jax.random.uniform(kw, (fan_out, fan_in), jnp.float32, -bound, bound)
        b = jax.random.uniform(kb, (fan_out,), jnp.float32, -bound, bound)
        return w, b

    w1, b1 = lin(ks[0], ks[1], Ns, 400)
    w2, b2 = lin(ks[2], ks[3], 400 + Na, 300)
    w3, b3 = lin(ks[4], ks[5], 300, 1)
    return {"w1": w1, "b1": b1, "w2": w2, "b2": b2, "w3": w3, "b3": b3}


def critic_ref(s, a, p):
    """Pure-JAX f32 reference matching the PyTorch module."""
    x = jnp.maximum(s @ p["w1"].T + p["b1"], 0.0)
    x = jnp.concatenate([x, a], axis=1)
    x = jnp.maximum(x @ p["w2"].T + p["b2"], 0.0)
    return x @ p["w3"].T + p["b3"]


def critic_ref_prepared(s, a, prep):
    """Pure-JAX emulation of the exact kernel math (same padded/bf16 weights + bf16 h1)."""
    cdt = prep["w1"].dtype
    h1 = jnp.dot(s.astype(cdt), prep["w1"], preferred_element_type=jnp.float32)
    h1 = jnp.maximum(h1 + prep["b1"], 0.0).astype(cdt)
    h2 = jnp.dot(h1, prep["w2s"], preferred_element_type=jnp.float32)
    h2 = h2 + jnp.dot(a.astype(cdt), prep["w2a"], preferred_element_type=jnp.float32)
    h2 = jnp.maximum(h2 + prep["b2"], 0.0)
    return jnp.sum(h2 * prep["w3"], axis=-1, keepdims=True) + prep["b3"]


if __name__ == "__main__":
    B, Ns, Na = 8, 16, 4
    key = jax.random.PRNGKey(0)
    k_s, k_a, k_p = jax.random.split(key, 3)

    s = jax.random.normal(k_s, (B, Ns), jnp.float32)
    a = jax.random.normal(k_a, (B, Na), jnp.float32)
    params = init_critic_params(k_p, Ns, Na)

    # One-time weight preparation (transpose/split/pad/bf16), hoisted out of
    # the per-call path.
    prep = prepare_critic_params(params)

    q = critic_forward(s, a, prep)
    jax.block_until_ready(q)
    assert q.shape == (B, 1), q.shape

    # Tight check against a pure-JAX emulation of the exact kernel arithmetic.
    q_prep_ref = critic_ref_prepared(s, a, prep)
    assert jnp.allclose(q, q_prep_ref, atol=2e-3, rtol=2e-3), (q, q_prep_ref)

    # Loose sanity check against the full-f32 PyTorch-equivalent reference
    # (differences only from bf16 MXU inputs / bf16 h1; accumulation stays f32).
    q_f32 = critic_ref(s, a, params)
    assert jnp.allclose(q, q_f32, atol=5e-2, rtol=5e-2), (q, q_f32)

    print("KERNEL_OK")
</pallas_src>

<mosaic_0001>
module attributes {stable_mosaic.version = 11 : i64} {
  func.func @_critic_kernel(%arg0: i32, %arg1: memref<8x16xf32, #tpu.memory_space<vmem>>, %arg2: memref<8x4xf32, #tpu.memory_space<vmem>>, %arg3: memref<16x512xbf16, #tpu.memory_space<vmem>>, %arg4: memref<1x512xf32, #tpu.memory_space<vmem>>, %arg5: memref<512x384xbf16, #tpu.memory_space<vmem>>, %arg6: memref<4x384xbf16, #tpu.memory_space<vmem>>, %arg7: memref<1x384xf32, #tpu.memory_space<vmem>>, %arg8: memref<1x384xf32, #tpu.memory_space<vmem>>, %arg9: memref<1x1xf32, #tpu.memory_space<vmem>>, %arg10: memref<1x1x8xf32, #tpu.memory_space<vmem>>) attributes {dimension_semantics = [#tpu.dimension_semantics<parallel>], iteration_bounds = array<i64: 1>, scalar_prefetch = 0 : i64, scratch_operands = 0 : i64, tpu.core_type = #tpu.core_type<tc>, window_params = [{transform_indices = @transform_0, window_bounds = array<i64: 8, 16>}, {transform_indices = @transform_1, window_bounds = array<i64: 8, 4>}, {pipeline_mode = #tpu.pipeline_mode<synchronous>, transform_indices = @transform_2, window_bounds = array<i64: 16, 512>}, {pipeline_mode = #tpu.pipeline_mode<synchronous>, transform_indices = @transform_3, window_bounds = array<i64: 1, 512>}, {pipeline_mode = #tpu.pipeline_mode<synchronous>, transform_indices = @transform_4, window_bounds = array<i64: 512, 384>}, {pipeline_mode = #tpu.pipeline_mode<synchronous>, transform_indices = @transform_5, window_bounds = array<i64: 4, 384>}, {pipeline_mode = #tpu.pipeline_mode<synchronous>, transform_indices = @transform_6, window_bounds = array<i64: 1, 384>}, {pipeline_mode = #tpu.pipeline_mode<synchronous>, transform_indices = @transform_7, window_bounds = array<i64: 1, 384>}, {pipeline_mode = #tpu.pipeline_mode<synchronous>, transform_indices = @transform_8, window_bounds = array<i64: 1, 1>}, {transform_indices = @transform_9, window_bounds = array<i64: 1, 1, 8>}]} {
    %c0 = arith.constant 0 : index
    %c0_0 = arith.constant 0 : index
    %0 = vector.load %arg1[%c0, %c0_0] : memref<8x16xf32, #tpu.memory_space<vmem>>, vector<8x16xf32>
    %1 = arith.truncf %0 : vector<8x16xf32> to vector<8x16xbf16>
    %c0_1 = arith.constant 0 : index
    %c0_2 = arith.constant 0 : index
    %2 = vector.load %arg3[%c0_1, %c0_2] : memref<16x512xbf16, #tpu.memory_space<vmem>>, vector<16x512xbf16>
    %cst = arith.constant dense<0.000000e+00> : vector<8x512xf32>
    %3 = tpu.matmul %1, %2, %cst {dimension_numbers = #tpu.dot_dimension_numbers<[1], [0], [0], [1], [0, 0, 1, 1], [], []>} : vector<8x16xbf16>, vector<16x512xbf16>, vector<8x512xf32> -> vector<8x512xf32>
    %c0_3 = arith.constant 0 : index
    %c0_4 = arith.constant 0 : index
    %4 = vector.load %arg4[%c0_3, %c0_4] : memref<1x512xf32, #tpu.memory_space<vmem>>, vector<1x512xf32>
    %5 = vector.broadcast %4 : vector<1x512xf32> to vector<8x512xf32>
    %6 = arith.addf %3, %5 : vector<8x512xf32>
    %cst_5 = arith.constant 0.000000e+00 : f32
    %7 = vector.broadcast %cst_5 : f32 to vector<8x512xf32>
    %8 = arith.maximumf %6, %7 : vector<8x512xf32>
    %9 = arith.truncf %8 : vector<8x512xf32> to vector<8x512xbf16>
    %c0_6 = arith.constant 0 : index
    %c0_7 = arith.constant 0 : index
    %10 = vector.load %arg5[%c0_6, %c0_7] : memref<512x384xbf16, #tpu.memory_space<vmem>>, vector<512x384xbf16>
    %cst_8 = arith.constant dense<0.000000e+00> : vector<8x384xf32>
    %11 = tpu.matmul %9, %10, %cst_8 {dimension_numbers = #tpu.dot_dimension_numbers<[1], [0], [0], [1], [0, 0, 1, 1], [], []>} : vector<8x512xbf16>, vector<512x384xbf16>, vector<8x384xf32> -> vector<8x384xf32>
    %c0_9 = arith.constant 0 : index
    %c0_10 = arith.constant 0 : index
    %12 = vector.load %arg2[%c0_9, %c0_10] : memref<8x4xf32, #tpu.memory_space<vmem>>, vector<8x4xf32>
    %13 = arith.truncf %12 : vector<8x4xf32> to vector<8x4xbf16>
    %c0_11 = arith.constant 0 : index
    %c0_12 = arith.constant 0 : index
    %14 = vector.load %arg6[%c0_11, %c0_12] : memref<4x384xbf16, #tpu.memory_space<vmem>>, vector<4x384xbf16>
    %cst_13 = arith.constant dense<0.000000e+00> : vector<8x384xf32>
    %15 = tpu.matmul %13, %14, %cst_13 {dimension_numbers = #tpu.dot_dimension_numbers<[1], [0], [0], [1], [0, 0, 1, 1], [], []>} : vector<8x4xbf16>, vector<4x384xbf16>, vector<8x384xf32> -> vector<8x384xf32>
    %16 = arith.addf %11, %15 : vector<8x384xf32>
    %c0_14 = arith.constant 0 : index
    %c0_15 = arith.constant 0 : index
    %17 = vector.load %arg7[%c0_14, %c0_15] : memref<1x384xf32, #tpu.memory_space<vmem>>, vector<1x384xf32>
    %18 = vector.broadcast %17 : vector<1x384xf32> to vector<8x384xf32>
    %19 = arith.addf %16, %18 : vector<8x384xf32>
    %cst_16 = arith.constant 0.000000e+00 : f32
    %20 = vector.broadcast %cst_16 : f32 to vector<8x384xf32>
    %21 = arith.maximumf %19, %20 : vector<8x384xf32>
    %c0_17 = arith.constant 0 : index
    %c0_18 = arith.constant 0 : index
    %22 = vector.load %arg8[%c0_17, %c0_18] : memref<1x384xf32, #tpu.memory_space<vmem>>, vector<1x384xf32>
    %23 = vector.broadcast %22 : vector<1x384xf32> to vector<8x384xf32>
    %24 = arith.mulf %21, %23 : vector<8x384xf32>
    %cst_19 = arith.constant dense<0.000000e+00> : vector<8xf32>
    %25 = vector.multi_reduction <add>, %24, %cst_19 [1] : vector<8x384xf32> to vector<8xf32>
    %26 = vector.shape_cast %25 : vector<8xf32> to vector<1x1x8xf32>
    %c0_20 = arith.constant 0 : index
    %c0_21 = arith.constant 0 : index
    %27 = vector.load %arg9[%c0_20, %c0_21] : memref<1x1xf32, #tpu.memory_space<vmem>>, vector<1x1xf32>
    %28 = vector.shape_cast %27 : vector<1x1xf32> to vector<1x1x1xf32>
    %29 = vector.broadcast %28 : vector<1x1x1xf32> to vector<1x1x8xf32>
    %30 = arith.addf %26, %29 : vector<1x1x8xf32>
    %c0_22 = arith.constant 0 : index
    %c0_23 = arith.constant 0 : index
    %c0_24 = arith.constant 0 : index
    %31 = vector.load %arg10[%c0_22, %c0_23, %c0_24] : memref<1x1x8xf32, #tpu.memory_space<vmem>>, vector<1x1x8xf32>
    tpu.vector_store %arg10[%c0_22, %c0_23, %c0_24], %30 {strides = array<i32>} : memref<1x1x8xf32, #tpu.memory_space<vmem>>, vector<1x1x8xf32>,
    return
  }
  func.func @transform_0(%arg0: i32) -> (i32, i32) {
    %c0_i32 = arith.constant 0 : i32
    %c0_i32_0 = arith.constant 0 : i32
    return %arg0, %c0_i32 : i32, i32
  }
  func.func @transform_1(%arg0: i32) -> (i32, i32) {
    %c0_i32 = arith.constant 0 : i32
    %c0_i32_0 = arith.constant 0 : i32
    return %arg0, %c0_i32 : i32, i32
  }
  func.func @transform_2(%arg0: i32) -> (i32, i32) {
    %c0_i32 = arith.constant 0 : i32
    %c0_i32_0 = arith.constant 0 : i32
    %c0_i32_1 = arith.constant 0 : i32
    return %c0_i32, %c0_i32_0 : i32, i32
  }
  func.func @transform_3(%arg0: i32) -> (i32, i32) {
    %c0_i32 = arith.constant 0 : i32
    %c0_i32_0 = arith.constant 0 : i32
    %c0_i32_1 = arith.constant 0 : i32
    return %c0_i32, %c0_i32_0 : i32, i32
  }
  func.func @transform_4(%arg0: i32) -> (i32, i32) {
    %c0_i32 = arith.constant 0 : i32
    %c0_i32_0 = arith.constant 0 : i32
    %c0_i32_1 = arith.constant 0 : i32
    return %c0_i32, %c0_i32_0 : i32, i32
  }
  func.func @transform_5(%arg0: i32) -> (i32, i32) {
    %c0_i32 = arith.constant 0 : i32
    %c0_i32_0 = arith.constant 0 : i32
    %c0_i32_1 = arith.constant 0 : i32
    return %c0_i32, %c0_i32_0 : i32, i32
  }
  func.func @transform_6(%arg0: i32) -> (i32, i32) {
    %c0_i32 = arith.constant 0 : i32
    %c0_i32_0 = arith.constant 0 : i32
    %c0_i32_1 = arith.constant 0 : i32
    return %c0_i32, %c0_i32_0 : i32, i32
  }
  func.func @transform_7(%arg0: i32) -> (i32, i32) {
    %c0_i32 = arith.constant 0 : i32
    %c0_i32_0 = arith.constant 0 : i32
    %c0_i32_1 = arith.constant 0 : i32
    return %c0_i32, %c0_i32_0 : i32, i32
  }
  func.func @transform_8(%arg0: i32) -> (i32, i32) {
    %c0_i32 = arith.constant 0 : i32
    %c0_i32_0 = arith.constant 0 : i32
    %c0_i32_1 = arith.constant 0 : i32
    return %c0_i32, %c0_i32_0 : i32, i32
  }
  func.func @transform_9(%arg0: i32) -> (i32, i32, i32) {
    %c0_i32 = arith.constant 0 : i32
    %c0_i32_0 = arith.constant 0 : i32
    %c0_i32_1 = arith.constant 0 : i32
    return %arg0, %c0_i32, %c0_i32_0 : i32, i32, i32
  }
}

</mosaic_0001>

<llo_original>
// kernel: tpu_custom_call.1
$region0: #{tpu_custom_call.1}
  #allocation0 [shape = 'u32[]', space=smem, size = 0x4, offset = 0x4, fixed_abs, tag = 'smem constant byte address 0x4 - core index']
  #allocation1 [shape = 'u32[144,128]{1,0:T(1,128)}', space=vmem, size = 0x12000, scoped, tag = 'internal scratch']
  #allocation2 [shape = 'f32[1,1]{1,0:T(1,128)S(1)}', space=vmem, size = 0x200, scoped, tag = 'scoped memory for tpu_custom_call.1']
  %s0 = inlined_call_operand.vmem [shape: f32[8,16], index: 0, kind: input, shape index: {}]
  %s1 = inlined_call_operand.vmem [shape: f32[8,4], index: 1, kind: input, shape index: {}]
  %s2 = inlined_call_operand.hbm [shape: bf16[16,512], index: 2, kind: input, shape index: {}]
  %s3 = inlined_call_operand.vmem [shape: f32[1,512], index: 3, kind: input, shape index: {}]
  %s4 = inlined_call_operand.hbm [shape: bf16[512,384], index: 4, kind: input, shape index: {}]
  %s5 = inlined_call_operand.vmem [shape: bf16[4,384], index: 5, kind: input, shape index: {}]
  %s6 = inlined_call_operand.vmem [shape: f32[1,384], index: 6, kind: input, shape index: {}]
  %s7 = inlined_call_operand.vmem [shape: f32[1,384], index: 7, kind: input, shape index: {}]
  %s8 = inlined_call_operand.<no memory space> [shape: f32[1,1], index: 8, kind: input, shape index: {}]
  %s9 = inlined_call_operand.hbm [shape: f32[1,1,8], index: 9, kind: output, shape index: {}]
  %s10 = sld [smem:[#allocation0]]
  $region54: #{tpu_custom_call.1} parent=0
    _
  %s12 = ssub.s32 1, %s10
  %s13 = scalar_select 0, %s12, %s10
  %v14 = vstv %s8
  %15 = vst [vmem:[#allocation2] sm:$0x1] %v14
  $region1: #{tpu_custom_call.1} parent=0
    #allocation3 [shape = 'u8[16384]{0}', space=vmem, size = 0x4000, scoped, tag = 'input window, operand 2, single buffered']
    #allocation4 [shape = 's32[1]{0}', space=sflag, size = 0x4, scoped, tag = 'scoped memory for tpu_custom_call.1']
    #allocation5 [shape = 's32[1]{0}', space=sflag, size = 0x4, scoped, tag = 'scoped memory for tpu_custom_call.1']
    #allocation6 [shape = 'u8[393216]{0}', space=vmem, size = 0x60000, scoped, tag = 'input window, operand 4, single buffered']
    #allocation7 [shape = 's32[1]{0}', space=sflag, size = 0x4, scoped, tag = 'scoped memory for tpu_custom_call.1']
    #allocation8 [shape = 'u8[512]{0}', space=vmem, size = 0x400, scoped, tag = 'output window, operand 0, single buffered']
    %16 = vsyncpa [#allocation4], 0
    %17 = vsyncpa [#allocation7], 0
    %18 = vsyncpa [#allocation5], 0
    // Predicated region
    $region2: #{tpu_custom_call.1} parent=1 // pred_check
      _
    $region3: #{tpu_custom_call.1} parent=1 // pred_check_branch
      %20 = sbr.rel (0) target = $region5
    $region4: #{tpu_custom_call.1} parent=1 // pred_region
      _
    $region5: #{tpu_custom_call.1} parent=1 // pred_fallthru
      _
    // Predicated region
    $region6: #{tpu_custom_call.1} parent=1 // pred_check
      _
    $region7: #{tpu_custom_call.1} parent=1 // pred_check_branch
      %22 = sbr.rel (0) target = $region9
    $region8: #{tpu_custom_call.1} parent=1 // pred_region
      _
    $region9: #{tpu_custom_call.1} parent=1 // pred_fallthru
      _
    // Predicated region
    $region10: #{tpu_custom_call.1} parent=1 // pred_check
      _
    $region11: #{tpu_custom_call.1} parent=1 // pred_check_branch
      %24 = sbr.rel (0) target = $region13
    $region12: #{tpu_custom_call.1} parent=1 // pred_region
      %s26 = ssub.s32 512, 512
      %27 = vsyncadd [#allocation4], %s26
      %s28 = sshll.u32 [#allocation3], 4
      %s29 = int_to_ptr.vmem [resolvable:$true] %s28
      %34 = dma.hbm_to_vmem [thread:$0]  %s2, 512, %s29, [#allocation4], 256, 256, 16
    $region13: #{tpu_custom_call.1} parent=1 // pred_fallthru
      _
    // Predicated region
    $region14: #{tpu_custom_call.1} parent=1 // pred_check
      _
    $region15: #{tpu_custom_call.1} parent=1 // pred_check_branch
      %36 = sbr.rel (0) target = $region17
    $region16: #{tpu_custom_call.1} parent=1 // pred_region
      _
    $region17: #{tpu_custom_call.1} parent=1 // pred_fallthru
      _
    // Predicated region
    $region18: #{tpu_custom_call.1} parent=1 // pred_check
      _
    $region19: #{tpu_custom_call.1} parent=1 // pred_check_branch
      %38 = sbr.rel (0) target = $region21
    $region20: #{tpu_custom_call.1} parent=1 // pred_region
      %s40 = ssub.s32 12288, 12288
      %41 = vsyncadd [#allocation7], %s40
      %s42 = sshll.u32 [#allocation6], 4
      %s43 = int_to_ptr.vmem [resolvable:$true] %s42
      %48 = dma.hbm_to_vmem [thread:$0]  %s4, 12288, %s43, [#allocation7], 192, 192, 12
    $region21: #{tpu_custom_call.1} parent=1 // pred_fallthru
      _
    // Predicated region
    $region22: #{tpu_custom_call.1} parent=1 // pred_check
      _
    $region23: #{tpu_custom_call.1} parent=1 // pred_check_branch
      %50 = sbr.rel (0) target = $region25
    $region24: #{tpu_custom_call.1} parent=1 // pred_region
      _
    $region25: #{tpu_custom_call.1} parent=1 // pred_fallthru
      _
    // Predicated region
    $region26: #{tpu_custom_call.1} parent=1 // pred_check
      _
    $region27: #{tpu_custom_call.1} parent=1 // pred_check_branch
      %52 = sbr.rel (0) target = $region29
    $region28: #{tpu_custom_call.1} parent=1 // pred_region
      _
    $region29: #{tpu_custom_call.1} parent=1 // pred_fallthru
      _
    // Predicated region
    $region30: #{tpu_custom_call.1} parent=1 // pred_check
      _
    $region31: #{tpu_custom_call.1} parent=1 // pred_check_branch
      %54 = sbr.rel (0) target = $region33
    $region32: #{tpu_custom_call.1} parent=1 // pred_region
      _
    $region33: #{tpu_custom_call.1} parent=1 // pred_fallthru
      _
    // Predicated region
    $region34: #{tpu_custom_call.1} parent=1 // pred_check
      _
    $region35: #{tpu_custom_call.1} parent=1 // pred_check_branch
      %56 = sbr.rel (0) target = $region37
    $region36: #{tpu_custom_call.1} parent=1 // pred_region
      _
    $region37: #{tpu_custom_call.1} parent=1 // pred_fallthru
      _
    // Predicated region
    $region38: #{tpu_custom_call.1} parent=1 // pred_check
      _
    $region39: #{tpu_custom_call.1} parent=1 // pred_check_branch
      %58 = sbr.rel (0) target = $region41
    $region40: #{tpu_custom_call.1} parent=1 // pred_region
      %59 = dma.done [#allocation4], 512
    $region41: #{tpu_custom_call.1} parent=1 // pred_fallthru
      _
    // Predicated region
    $region42: #{tpu_custom_call.1} parent=1 // pred_check
      _
    $region43: #{tpu_custom_call.1} parent=1 // pred_check_branch
      %61 = sbr.rel (0) target = $region45
    $region44: #{tpu_custom_call.1} parent=1 // pred_region
      %62 = dma.done [#allocation7], 12288
    $region45: #{tpu_custom_call.1} parent=1 // pred_fallthru
      _
    %v64 = vld [vmem:[%s0] sm:$0xff]
    %v65 = vpack.c.bf16 %v64, %v64
    %v66 = vld [vmem:[#allocation3] sm:$0xff]
    %v67 = vld [vmem:[#allocation3 + $0x8] sm:$0xff]
    %v68 = vld [vmem:[#allocation3 + $0x10] sm:$0xff]
    %v69 = vld [vmem:[#allocation3 + $0x18] sm:$0xff]
    %v70 = vld [vmem:[%s3] sm:$0xf]
    %v72 = vlaneseq
    %v73 = vshrl.u32 %v72, 7
    %v74 = vsub.s32 0, %v73
    %v75 = vrot.slane %v70, %v74
    %v76 = vlaneseq
    %v77 = vshrl.u32 %v76, 7
    %v78 = vsub.s32 1, %v77
    %v79 = vrot.slane %v70, %v78
    %v80 = vlaneseq
    %v81 = vshrl.u32 %v80, 7
    %v82 = vsub.s32 2, %v81
    %v83 = vrot.slane %v70, %v82
    %v84 = vlaneseq
    %v85 = vshrl.u32 %v84, 7
    %v86 = vsub.s32 3, %v85
    %v87 = vrot.slane %v70, %v86
    %v96 = vunpack.c.l.b16 %v66
    %v97 = vunpack.c.h.b16 %v66
    %v98 = vunpack.c.l.b16 %v67
    %v99 = vunpack.c.h.b16 %v67
    %v100 = vunpack.c.l.b16 %v68
    %v101 = vunpack.c.h.b16 %v68
    %v102 = vunpack.c.l.b16 %v69
    %v103 = vunpack.c.h.b16 %v69
    %v104 = vpack.c.b16 %v100, %v96
    %v105 = vpack.c.b16 %v101, %v97
    %v106 = vpack.c.b16 %v102, %v98
    %v107 = vpack.c.b16 %v103, %v99
    %vm112 = vcmask 130048
    %v114 = vsel %vm112, %v65, 0
    %116 = vmatprep.subr.bf16.mxu0 %v105
    %117 = vmatpush1.bf16.msra.mxu0 %v104
    %118 = vmatprep.subr.bf16.mxu0 0
    %119 = vmatpush1.bf16.msra.mxu0 0
    %120 = vmatprep.subr.bf16.mxu0 0
    %121 = vmatpush1.bf16.msra.mxu0 0
    %122 = vmatprep.subr.bf16.mxu0 0
    %123 = vmatpush1.bf16.msra.mxu0 0
    %124 = vmatprep.subr.bf16.mxu0 0
    %125 = vmatpush1.bf16.msra.mxu0 0
    %126 = vmatprep.subr.bf16.mxu0 0
    %127 = vmatpush1.bf16.msra.mxu0 0
    %128 = vmatprep.subr.bf16.mxu0 0
    %129 = vmatpush1.bf16.msra.mxu0 0
    %130 = vmatprep.subr.bf16.mxu0 0
    %131 = vmatpush1.bf16.msra.mxu0 0
    %132 = vmatprep.subr.bf16.mxu0 0
    %133 = vmatpush1.bf16.msra.mxu0 0
    %134 = vmatprep.subr.bf16.mxu0 0
    %135 = vmatpush1.bf16.msra.mxu0 0
    %136 = vmatprep.subr.bf16.mxu0 0
    %137 = vmatpush1.bf16.msra.mxu0 0
    %138 = vmatprep.subr.bf16.mxu0 0
    %139 = vmatpush1.bf16.msra.mxu0 0
    %140 = vmatprep.subr.bf16.mxu0 0
    %141 = vmatpush1.bf16.msra.mxu0 0
    %142 = vmatprep.subr.bf16.mxu0 0
    %143 = vmatpush1.bf16.msra.mxu0 0
    %144 = vmatprep.subr.bf16.mxu0 0
    %145 = vmatpush1.bf16.msra.mxu0 0
    %146 = vmatprep.subr.bf16.mxu0 0
    %147 = vmatpush1.bf16.msra.mxu0 0
    %148 = vmatprep.mubr.bf16.mxu0 0
    %149 = vmatmul.mubr.bf16.gmra.mrb[0].mxu0 %v114
    %v150 = vpop.f32.mrb[0].mxu0
    %v151 = vadd.f32 %v75, %v150
    %v152 = vpop.f32.mrb[0].mxu0
    %v153 = vadd.f32 %v79, %v152
    %v154 = vpop.f32.mrb[0].mxu0
    %v155 = vpop.f32.mrb[0].mxu0
    %156 = vdwg.mxu0
    %157 = vmatprep.subr.bf16.mxu0 %v107
    %158 = vmatpush1.bf16.msra.mxu0 %v106
    %159 = vmatprep.subr.bf16.mxu0 0
    %160 = vmatpush1.bf16.msra.mxu0 0
    %161 = vmatprep.subr.bf16.mxu0 0
    %162 = vmatpush1.bf16.msra.mxu0 0
    %163 = vmatprep.subr.bf16.mxu0 0
    %164 = vmatpush1.bf16.msra.mxu0 0
    %165 = vmatprep.subr.bf16.mxu0 0
    %166 = vmatpush1.bf16.msra.mxu0 0
    %167 = vmatprep.subr.bf16.mxu0 0
    %168 = vmatpush1.bf16.msra.mxu0 0
    %169 = vmatprep.subr.bf16.mxu0 0
    %170 = vmatpush1.bf16.msra.mxu0 0
    %171 = vmatprep.subr.bf16.mxu0 0
    %172 = vmatpush1.bf16.msra.mxu0 0
    %173 = vmatprep.subr.bf16.mxu0 0
    %174 = vmatpush1.bf16.msra.mxu0 0
    %175 = vmatprep.subr.bf16.mxu0 0
    %176 = vmatpush1.bf16.msra.mxu0 0
    %177 = vmatprep.subr.bf16.mxu0 0
    %178 = vmatpush1.bf16.msra.mxu0 0
    %179 = vmatprep.subr.bf16.mxu0 0
    %180 = vmatpush1.bf16.msra.mxu0 0
    %181 = vmatprep.subr.bf16.mxu0 0
    %182 = vmatpush1.bf16.msra.mxu0 0
    %183 = vmatprep.subr.bf16.mxu0 0
    %184 = vmatpush1.bf16.msra.mxu0 0
    %185 = vmatprep.subr.bf16.mxu0 0
    %186 = vmatpush1.bf16.msra.mxu0 0
    %187 = vmatprep.subr.bf16.mxu0 0
    %188 = vmatpush1.bf16.msra.mxu0 0
    %189 = vmatprep.mubr.bf16.mxu0 0
    %190 = vmatmul.mubr.bf16.gmra.mrb[0].mxu0 %v114
    %v191 = vpop.f32.mrb[0].mxu0
    %v192 = vadd.f32 %v83, %v191
    %v193 = vpop.f32.mrb[0].mxu0
    %v194 = vadd.f32 %v87, %v193
    %v195 = vpop.f32.mrb[0].mxu0
    %v196 = vpop.f32.mrb[0].mxu0
    %197 = vdwg.mxu0
    %v198 = vmax.f32 %v151, 0.0
    %v199 = vmax.f32 %v153, 0.0
    %v200 = vmax.f32 %v192, 0.0
    %v201 = vmax.f32 %v194, 0.0
    %v202 = vpack.c.bf16 %v198, %v198
    %v203 = vpack.c.bf16 %v199, %v199
    %v204 = vpack.c.bf16 %v200, %v200
    %v205 = vpack.c.bf16 %v201, %v201
    %v206 = vld [vmem:[#allocation6] sm:$0xff]
    %v207 = vld [vmem:[#allocation6 + $0x8] sm:$0xf]
    %v208 = vld [vmem:[#allocation6 + $0xc] sm:$0xff]
    %v209 = vld [vmem:[#allocation6 + $0x14] sm:$0xf]
    %v210 = vld [vmem:[#allocation6 + $0x18] sm:$0xff]
    %v211 = vld [vmem:[#allocation6 + $0x20] sm:$0xf]
    %v212 = vld [vmem:[#allocation6 + $0x24] sm:$0xff]
    %v213 = vld [vmem:[#allocation6 + $0x2c] sm:$0xf]
    %v214 = vld [vmem:[#allocation6 + $0x30] sm:$0xff]
    %v215 = vld [vmem:[#allocation6 + $0x38] sm:$0xf]
    %v216 = vld [vmem:[#allocation6 + $0x3c] sm:$0xff]
    %v217 = vld [vmem:[#allocation6 + $0x44] sm:$0xf]
    %v218 = vld [vmem:[#allocation6 + $0x48] sm:$0xff]
    %v219 = vld [vmem:[#allocation6 + $0x50] sm:$0xf]
    %v220 = vld [vmem:[#allocation6 + $0x54] sm:$0xff]
    %v221 = vld [vmem:[#allocation6 + $0x5c] sm:$0xf]
    %v222 = vld [vmem:[#allocation6 + $0x60] sm:$0xff]
    %v223 = vld [vmem:[#allocation6 + $0x68] sm:$0xf]
    %v224 = vld [vmem:[#allocation6 + $0x6c] sm:$0xff]
    %v225 = vld [vmem:[#allocation6 + $0x74] sm:$0xf]
    %v226 = vld [vmem:[#allocation6 + $0x78] sm:$0xff]
    %v227 = vld [vmem:[#allocation6 + $0x80] sm:$0xf]
    %v228 = vld [vmem:[#allocation6 + $0x84] sm:$0xff]
    %v229 = vld [vmem:[#allocation6 + $0x8c] sm:$0xf]
    %v230 = vld [vmem:[#allocation6 + $0x90] sm:$0xff]
    %v231 = vld [vmem:[#allocation6 + $0x98] sm:$0xf]
    %v232 = vld [vmem:[#allocation6 + $0x9c] sm:$0xff]
    %v233 = vld [vmem:[#allocation6 + $0xa4] sm:$0xf]
    %v234 = vld [vmem:[#allocation6 + $0xa8] sm:$0xff]
    %v235 = vld [vmem:[#allocation6 + $0xb0] sm:$0xf]
    %v236 = vld [vmem:[#allocation6 + $0xb4] sm:$0xff]
    %v237 = vld [vmem:[#allocation6 + $0xbc] sm:$0xf]
    %v238 = vld [vmem:[#allocation6 + $0xc0] sm:$0xff]
    %v239 = vld [vmem:[#allocation6 + $0xc8] sm:$0xf]
    %v240 = vld [vmem:[#allocation6 + $0xcc] sm:$0xff]
    %v241 = vld [vmem:[#allocation6 + $0xd4] sm:$0xf]
    %v242 = vld [vmem:[#allocation6 + $0xd8] sm:$0xff]
    %v243 = vld [vmem:[#allocation6 + $0xe0] sm:$0xf]
    %v244 = vld [vmem:[#allocation6 + $0xe4] sm:$0xff]
    %v245 = vld [vmem:[#allocation6 + $0xec] sm:$0xf]
    %v246 = vld [vmem:[#allocation6 + $0xf0] sm:$0xff]
    %v247 = vld [vmem:[#allocation6 + $0xf8] sm:$0xf]
    %v248 = vld [vmem:[#allocation6 + $0xfc] sm:$0xff]
    %v249 = vld [vmem:[#allocation6 + $0x104] sm:$0xf]
    %v250 = vld [vmem:[#allocation6 + $0x108] sm:$0xff]
    %v251 = vld [vmem:[#allocation6 + $0x110] sm:$0xf]
    %v252 = vld [vmem:[#allocation6 + $0x114] sm:$0xff]
    %v253 = vld [vmem:[#allocation6 + $0x11c] sm:$0xf]
    %v254 = vld [vmem:[#allocation6 + $0x120] sm:$0xff]
    %v255 = vld [vmem:[#allocation6 + $0x128] sm:$0xf]
    %v256 = vld [vmem:[#allocation6 + $0x12c] sm:$0xff]
    %v257 = vld [vmem:[#allocation6 + $0x134] sm:$0xf]
    %v258 = vld [vmem:[#allocation6 + $0x138] sm:$0xff]
    %v259 = vld [vmem:[#allocation6 + $0x140] sm:$0xf]
    %v260 = vld [vmem:[#allocation6 + $0x144] sm:$0xff]
    %v261 = vld [vmem:[#allocation6 + $0x14c] sm:$0xf]
    %v262 = vld [vmem:[#allocation6 + $0x150] sm:$0xff]
    %v263 = vld [vmem:[#allocation6 + $0x158] sm:$0xf]
    %v264 = vld [vmem:[#allocation6 + $0x15c] sm:$0xff]
    %v265 = vld [vmem:[#allocation6 + $0x164] sm:$0xf]
    %v266 = vld [vmem:[#allocation6 + $0x168] sm:$0xff]
    %v267 = vld [vmem:[#allocation6 + $0x170] sm:$0xf]
    %v268 = vld [vmem:[#allocation6 + $0x174] sm:$0xff]
    %v269 = vld [vmem:[#allocation6 + $0x17c] sm:$0xf]
    %v270 = vld [vmem:[#allocation6 + $0x180] sm:$0xff]
    %v271 = vld [vmem:[#allocation6 + $0x188] sm:$0xf]
    %v272 = vld [vmem:[#allocation6 + $0x18c] sm:$0xff]
    %v273 = vld [vmem:[#allocation6 + $0x194] sm:$0xf]
    %v274 = vld [vmem:[#allocation6 + $0x198] sm:$0xff]
    %v275 = vld [vmem:[#allocation6 + $0x1a0] sm:$0xf]
    %v276 = vld [vmem:[#allocation6 + $0x1a4] sm:$0xff]
    %v277 = vld [vmem:[#allocation6 + $0x1ac] sm:$0xf]
    %v278 = vld [vmem:[#allocation6 + $0x1b0] sm:$0xff]
    %v279 = vld [vmem:[#allocation6 + $0x1b8] sm:$0xf]
    %v280 = vld [vmem:[#allocation6 + $0x1bc] sm:$0xff]
    %v281 = vld [vmem:[#allocation6 + $0x1c4] sm:$0xf]
    %v282 = vld [vmem:[#allocation6 + $0x1c8] sm:$0xff]
    %v283 = vld [vmem:[#allocation6 + $0x1d0] sm:$0xf]
    %v284 = vld [vmem:[#allocation6 + $0x1d4] sm:$0xff]
    %v285 = vld [vmem:[#allocation6 + $0x1dc] sm:$0xf]
    %v286 = vld [vmem:[#allocation6 + $0x1e0] sm:$0xff]
    %v287 = vld [vmem:[#allocation6 + $0x1e8] sm:$0xf]
    %v288 = vld [vmem:[#allocation6 + $0x1ec] sm:$0xff]
    %v289 = vld [vmem:[#allocation6 + $0x1f4] sm:$0xf]
    %v290 = vld [vmem:[#allocation6 + $0x1f8] sm:$0xff]
    %v291 = vld [vmem:[#allocation6 + $0x200] sm:$0xf]
    %v292 = vld [vmem:[#allocation6 + $0x204] sm:$0xff]
    %v293 = vld [vmem:[#allocation6 + $0x20c] sm:$0xf]
    %v294 = vld [vmem:[#allocation6 + $0x210] sm:$0xff]
    %v295 = vld [vmem:[#allocation6 + $0x218] sm:$0xf]
    %v296 = vld [vmem:[#allocation6 + $0x21c] sm:$0xff]
    %v297 = vld [vmem:[#allocation6 + $0x224] sm:$0xf]
    %v298 = vld [vmem:[#allocation6 + $0x228] sm:$0xff]
    %v299 = vld [vmem:[#allocation6 + $0x230] sm:$0xf]
    %v300 = vld [vmem:[#allocation6 + $0x234] sm:$0xff]
    %v301 = vld [vmem:[#allocation6 + $0x23c] sm:$0xf]
    %v302 = vld [vmem:[#allocation6 + $0x240] sm:$0xff]
    %v303 = vld [vmem:[#allocation6 + $0x248] sm:$0xf]
    %v304 = vld [vmem:[#allocation6 + $0x24c] sm:$0xff]
    %v305 = vld [vmem:[#allocation6 + $0x254] sm:$0xf]
    %v306 = vld [vmem:[#allocation6 + $0x258] sm:$0xff]
    %v307 = vld [vmem:[#allocation6 + $0x260] sm:$0xf]
    %v308 = vld [vmem:[#allocation6 + $0x264] sm:$0xff]
    %v309 = vld [vmem:[#allocation6 + $0x26c] sm:$0xf]
    %v310 = vld [vmem:[#allocation6 + $0x270] sm:$0xff]
    %v311 = vld [vmem:[#allocation6 + $0x278] sm:$0xf]
    %v312 = vld [vmem:[#allocation6 + $0x27c] sm:$0xff]
    %v313 = vld [vmem:[#allocation6 + $0x284] sm:$0xf]
    %v314 = vld [vmem:[#allocation6 + $0x288] sm:$0xff]
    %v315 = vld [vmem:[#allocation6 + $0x290] sm:$0xf]
    %v316 = vld [vmem:[#allocation6 + $0x294] sm:$0xff]
    %v317 = vld [vmem:[#allocation6 + $0x29c] sm:$0xf]
    %v318 = vld [vmem:[#allocation6 + $0x2a0] sm:$0xff]
    %v319 = vld [vmem:[#allocation6 + $0x2a8] sm:$0xf]
    %v320 = vld [vmem:[#allocation6 + $0x2ac] sm:$0xff]
    %v321 = vld [vmem:[#allocation6 + $0x2b4] sm:$0xf]
    %v322 = vld [vmem:[#allocation6 + $0x2b8] sm:$0xff]
    %v323 = vld [vmem:[#allocation6 + $0x2c0] sm:$0xf]
    %v324 = vld [vmem:[#allocation6 + $0x2c4] sm:$0xff]
    %v325 = vld [vmem:[#allocation6 + $0x2cc] sm:$0xf]
    %v326 = vld [vmem:[#allocation6 + $0x2d0] sm:$0xff]
    %v327 = vld [vmem:[#allocation6 + $0x2d8] sm:$0xf]
    %v328 = vld [vmem:[#allocation6 + $0x2dc] sm:$0xff]
    %v329 = vld [vmem:[#allocation6 + $0x2e4] sm:$0xf]
    %v330 = vld [vmem:[#allocation6 + $0x2e8] sm:$0xff]
    %v331 = vld [vmem:[#allocation6 + $0x2f0] sm:$0xf]
    %v332 = vld [vmem:[#allocation6 + $0x2f4] sm:$0xff]
    %v333 = vld [vmem:[#allocation6 + $0x2fc] sm:$0xf]
    %v334 = vld [vmem:[%s1] sm:$0xff]
    %v335 = vpack.c.bf16 %v334, %v334
    %v336 = vld [vmem:[%s5] sm:$0x3f]
    %v338 = vcombine.high %v336, %v336
    %v340 = vunpack.c.l.s4 1983009808
    %v341 = vunpack.c.0.s8 %v340
    %v342 = vlaneseq
    %v343 = vshrl.u32 %v342, 7
    %v344 = vsub.s32 %v341, %v343
    %v345 = vrot.slane %v336, %v344
    %v347 = vunpack.c.l.s4 1983009808
    %v348 = vunpack.c.0.s8 %v347
    %v349 = vlaneseq
    %v350 = vshrl.u32 %v349, 7
    %v351 = vsub.s32 %v348, %v350
    %v352 = vrot.slane %v338, %v351
    %v353 = vcombine.high %v345, %v345
    %vm354 = vcmask 31744
    %v356 = vsel %vm354, %v335, 0
    %vm358 = vcmask 1041408
    %v360 = vsel %vm358, %v345, 0
    %v363 = vsel %vm358, %v353, 0
    %v366 = vsel %vm358, %v352, 0
    %368 = vmatprep.subr.bf16.mxu0 %v363
    %369 = vmatpush1.bf16.msra.mxu0 %v360
    %370 = vmatprep.subr.bf16.mxu0 0
    %371 = vmatpush1.bf16.msra.mxu0 0
    %372 = vmatprep.subr.bf16.mxu0 0
    %373 = vmatpush1.bf16.msra.mxu0 0
    %374 = vmatprep.subr.bf16.mxu0 0
    %375 = vmatpush1.bf16.msra.mxu0 0
    %376 = vmatprep.subr.bf16.mxu0 0
    %377 = vmatpush1.bf16.msra.mxu0 0
    %378 = vmatprep.subr.bf16.mxu0 0
    %379 = vmatpush1.bf16.msra.mxu0 0
    %380 = vmatprep.subr.bf16.mxu0 0
    %381 = vmatpush1.bf16.msra.mxu0 0
    %382 = vmatprep.subr.bf16.mxu0 0
    %383 = vmatpush1.bf16.msra.mxu0 0
    %384 = vmatprep.subr.bf16.mxu0 0
    %385 = vmatpush1.bf16.msra.mxu0 0
    %386 = vmatprep.subr.bf16.mxu0 0
    %387 = vmatpush1.bf16.msra.mxu0 0
    %388 = vmatprep.subr.bf16.mxu0 0
    %389 = vmatpush1.bf16.msra.mxu0 0
    %390 = vmatprep.subr.bf16.mxu0 0
    %391 = vmatpush1.bf16.msra.mxu0 0
    %392 = vmatprep.subr.bf16.mxu0 0
    %393 = vmatpush1.bf16.msra.mxu0 0
    %394 = vmatprep.subr.bf16.mxu0 0
    %395 = vmatpush1.bf16.msra.mxu0 0
    %396 = vmatprep.subr.bf16.mxu0 0
    %397 = vmatpush1.bf16.msra.mxu0 0
    %398 = vmatprep.subr.bf16.mxu0 0
    %399 = vmatpush1.bf16.msra.mxu0 0
    %400 = vmatprep.mubr.bf16.mxu0 0
    %401 = vmatmul.mubr.bf16.gmra.mrb[0].mxu0 %v356
    %v402 = vpop.f32.mrb[0].mxu0
    %v403 = vadd.f32 0.0, %v402
    %v404 = vpop.f32.mrb[0].mxu0
    %v405 = vadd.f32 0.0, %v404
    %v406 = vpop.f32.mrb[0].mxu0
    %v407 = vpop.f32.mrb[0].mxu0
    %408 = vdwg.mxu0
    %409 = vmatprep.subr.bf16.mxu0 0
    %410 = vmatpush1.bf16.msra.mxu0 %v366
    %411 = vmatprep.subr.bf16.mxu0 0
    %412 = vmatpush1.bf16.msra.mxu0 0
    %413 = vmatprep.subr.bf16.mxu0 0
    %414 = vmatpush1.bf16.msra.mxu0 0
    %415 = vmatprep.subr.bf16.mxu0 0
    %416 = vmatpush1.bf16.msra.mxu0 0
    %417 = vmatprep.subr.bf16.mxu0 0
    %418 = vmatpush1.bf16.msra.mxu0 0
    %419 = vmatprep.subr.bf16.mxu0 0
    %420 = vmatpush1.bf16.msra.mxu0 0
    %421 = vmatprep.subr.bf16.mxu0 0
    %422 = vmatpush1.bf16.msra.mxu0 0
    %423 = vmatprep.subr.bf16.mxu0 0
    %424 = vmatpush1.bf16.msra.mxu0 0
    %425 = vmatprep.subr.bf16.mxu0 0
    %426 = vmatpush1.bf16.msra.mxu0 0
    %427 = vmatprep.subr.bf16.mxu0 0
    %428 = vmatpush1.bf16.msra.mxu0 0
    %429 = vmatprep.subr.bf16.mxu0 0
    %430 = vmatpush1.bf16.msra.mxu0 0
    %431 = vmatprep.subr.bf16.mxu0 0
    %432 = vmatpush1.bf16.msra.mxu0 0
    %433 = vmatprep.subr.bf16.mxu0 0
    %434 = vmatpush1.bf16.msra.mxu0 0
    %435 = vmatprep.subr.bf16.mxu0 0
    %436 = vmatpush1.bf16.msra.mxu0 0
    %437 = vmatprep.subr.bf16.mxu0 0
    %438 = vmatpush1.bf16.msra.mxu0 0
    %439 = vmatprep.subr.bf16.mxu0 0
    %440 = vmatpush1.bf16.msra.mxu0 0
    %441 = vmatprep.mubr.bf16.mxu0 0
    %442 = vmatmul.mubr.bf16.gmra.mrb[0].mxu0 %v356
    %v443 = vpop.f32.mrb[0].mxu0
    %v444 = vadd.f32 0.0, %v443
    %v445 = vpop.f32.mrb[0].mxu0
    %v446 = vpop.f32.mrb[0].mxu0
    %v447 = vpop.f32.mrb[0].mxu0
    %448 = vdwg.mxu0
    %v577 = vunpack.c.l.b16 %v206
    %v578 = vunpack.c.h.b16 %v206
    %v579 = vunpack.c.l.b16 %v207
    %v580 = vunpack.c.l.b16 %v208
    %v581 = vunpack.c.h.b16 %v208
    %v582 = vunpack.c.l.b16 %v209
    %v583 = vunpack.c.l.b16 %v210
    %v584 = vunpack.c.h.b16 %v210
    %v585 = vunpack.c.l.b16 %v211
    %v586 = vunpack.c.l.b16 %v212
    %v587 = vunpack.c.h.b16 %v212
    %v588 = vunpack.c.l.b16 %v213
    %v589 = vunpack.c.l.b16 %v214
    %v590 = vunpack.c.h.b16 %v214
    %v591 = vunpack.c.l.b16 %v215
    %v592 = vunpack.c.l.b16 %v216
    %v593 = vunpack.c.h.b16 %v216
    %v594 = vunpack.c.l.b16 %v217
    %v595 = vunpack.c.l.b16 %v218
    %v596 = vunpack.c.h.b16 %v218
    %v597 = vunpack.c.l.b16 %v219
    %v598 = vunpack.c.l.b16 %v220
    %v599 = vunpack.c.h.b16 %v220
    %v600 = vunpack.c.l.b16 %v221
    %v601 = vunpack.c.l.b16 %v222
    %v602 = vunpack.c.h.b16 %v222
    %v603 = vunpack.c.l.b16 %v223
    %v604 = vunpack.c.l.b16 %v224
    %v605 = vunpack.c.h.b16 %v224
    %v606 = vunpack.c.l.b16 %v225
    %v607 = vunpack.c.l.b16 %v226
    %v608 = vunpack.c.h.b16 %v226
    %v609 = vunpack.c.l.b16 %v227
    %v610 = vunpack.c.l.b16 %v228
    %v611 = vunpack.c.h.b16 %v228
    %v612 = vunpack.c.l.b16 %v229
    %v613 = vunpack.c.l.b16 %v230
    %v614 = vunpack.c.h.b16 %v230
    %v615 = vunpack.c.l.b16 %v231
    %v616 = vunpack.c.l.b16 %v232
    %v617 = vunpack.c.h.b16 %v232
    %v618 = vunpack.c.l.b16 %v233
    %v619 = vunpack.c.l.b16 %v234
    %v620 = vunpack.c.h.b16 %v234
    %v621 = vunpack.c.l.b16 %v235
    %v622 = vunpack.c.l.b16 %v236
    %v623 = vunpack.c.h.b16 %v236
    %v624 = vunpack.c.l.b16 %v237
    %v625 = vunpack.c.l.b16 %v238
    %v626 = vunpack.c.h.b16 %v238
    %v627 = vunpack.c.l.b16 %v239
    %v628 = vunpack.c.l.b16 %v240
    %v629 = vunpack.c.h.b16 %v240
    %v630 = vunpack.c.l.b16 %v241
    %v631 = vunpack.c.l.b16 %v242
    %v632 = vunpack.c.h.b16 %v242
    %v633 = vunpack.c.l.b16 %v243
    %v634 = vunpack.c.l.b16 %v244
    %v635 = vunpack.c.h.b16 %v244
    %v636 = vunpack.c.l.b16 %v245
    %v637 = vunpack.c.l.b16 %v246
    %v638 = vunpack.c.h.b16 %v246
    %v639 = vunpack.c.l.b16 %v247
    %v640 = vunpack.c.l.b16 %v248
    %v641 = vunpack.c.h.b16 %v248
    %v642 = vunpack.c.l.b16 %v249
    %v643 = vunpack.c.l.b16 %v250
    %v644 = vunpack.c.h.b16 %v250
    %v645 = vunpack.c.l.b16 %v251
    %v646 = vunpack.c.l.b16 %v252
    %v647 = vunpack.c.h.b16 %v252
    %v648 = vunpack.c.l.b16 %v253
    %v649 = vunpack.c.l.b16 %v254
    %v650 = vunpack.c.h.b16 %v254
    %v651 = vunpack.c.l.b16 %v255
    %v652 = vunpack.c.l.b16 %v256
    %v653 = vunpack.c.h.b16 %v256
    %v654 = vunpack.c.l.b16 %v257
    %v655 = vunpack.c.l.b16 %v258
    %v656 = vunpack.c.h.b16 %v258
    %v657 = vunpack.c.l.b16 %v259
    %v658 = vunpack.c.l.b16 %v260
    %v659 = vunpack.c.h.b16 %v260
    %v660 = vunpack.c.l.b16 %v261
    %v661 = vunpack.c.l.b16 %v262
    %v662 = vunpack.c.h.b16 %v262
    %v663 = vunpack.c.l.b16 %v263
    %v664 = vunpack.c.l.b16 %v264
    %v665 = vunpack.c.h.b16 %v264
    %v666 = vunpack.c.l.b16 %v265
    %v667 = vunpack.c.l.b16 %v266
    %v668 = vunpack.c.h.b16 %v266
    %v669 = vunpack.c.l.b16 %v267
    %v670 = vunpack.c.l.b16 %v268
    %v671 = vunpack.c.h.b16 %v268
    %v672 = vunpack.c.l.b16 %v269
    %v673 = vunpack.c.l.b16 %v270
    %v674 = vunpack.c.h.b16 %v270
    %v675 = vunpack.c.l.b16 %v271
    %v676 = vunpack.c.l.b16 %v272
    %v677 = vunpack.c.h.b16 %v272
    %v678 = vunpack.c.l.b16 %v273
    %v679 = vunpack.c.l.b16 %v274
    %v680 = vunpack.c.h.b16 %v274
    %v681 = vunpack.c.l.b16 %v275
    %v682 = vunpack.c.l.b16 %v276
    %v683 = vunpack.c.h.b16 %v276
    %v684 = vunpack.c.l.b16 %v277
    %v685 = vunpack.c.l.b16 %v278
    %v686 = vunpack.c.h.b16 %v278
    %v687 = vunpack.c.l.b16 %v279
    %v688 = vunpack.c.l.b16 %v280
    %v689 = vunpack.c.h.b16 %v280
    %v690 = vunpack.c.l.b16 %v281
    %v691 = vunpack.c.l.b16 %v282
    %v692 = vunpack.c.h.b16 %v282
    %v693 = vunpack.c.l.b16 %v283
    %v694 = vunpack.c.l.b16 %v284
    %v695 = vunpack.c.h.b16 %v284
    %v696 = vunpack.c.l.b16 %v285
    %v697 = vunpack.c.l.b16 %v286
    %v698 = vunpack.c.h.b16 %v286
    %v699 = vunpack.c.l.b16 %v287
    %v700 = vunpack.c.l.b16 %v288
    %v701 = vunpack.c.h.b16 %v288
    %v702 = vunpack.c.l.b16 %v289
    %v703 = vunpack.c.l.b16 %v290
    %v704 = vunpack.c.h.b16 %v290
    %v705 = vunpack.c.l.b16 %v291
    %v706 = vunpack.c.l.b16 %v292
    %v707 = vunpack.c.h.b16 %v292
    %v708 = vunpack.c.l.b16 %v293
    %v709 = vunpack.c.l.b16 %v294
    %v710 = vunpack.c.h.b16 %v294
    %v711 = vunpack.c.l.b16 %v295
    %v712 = vunpack.c.l.b16 %v296
    %v713 = vunpack.c.h.b16 %v296
    %v714 = vunpack.c.l.b16 %v297
    %v715 = vunpack.c.l.b16 %v298
    %v716 = vunpack.c.h.b16 %v298
    %v717 = vunpack.c.l.b16 %v299
    %v718 = vunpack.c.l.b16 %v300
    %v719 = vunpack.c.h.b16 %v300
    %v720 = vunpack.c.l.b16 %v301
    %v721 = vunpack.c.l.b16 %v302
    %v722 = vunpack.c.h.b16 %v302
    %v723 = vunpack.c.l.b16 %v303
    %v724 = vunpack.c.l.b16 %v304
    %v725 = vunpack.c.h.b16 %v304
    %v726 = vunpack.c.l.b16 %v305
    %v727 = vunpack.c.l.b16 %v306
    %v728 = vunpack.c.h.b16 %v306
    %v729 = vunpack.c.l.b16 %v307
    %v730 = vunpack.c.l.b16 %v308
    %v731 = vunpack.c.h.b16 %v308
    %v732 = vunpack.c.l.b16 %v309
    %v733 = vunpack.c.l.b16 %v310
    %v734 = vunpack.c.h.b16 %v310
    %v735 = vunpack.c.l.b16 %v311
    %v736 = vunpack.c.l.b16 %v312
    %v737 = vunpack.c.h.b16 %v312
    %v738 = vunpack.c.l.b16 %v313
    %v739 = vunpack.c.l.b16 %v314
    %v740 = vunpack.c.h.b16 %v314
    %v741 = vunpack.c.l.b16 %v315
    %v742 = vunpack.c.l.b16 %v316
    %v743 = vunpack.c.h.b16 %v316
    %v744 = vunpack.c.l.b16 %v317
    %v745 = vunpack.c.l.b16 %v318
    %v746 = vunpack.c.h.b16 %v318
    %v747 = vunpack.c.l.b16 %v319
    %v748 = vunpack.c.l.b16 %v320
    %v749 = vunpack.c.h.b16 %v320
    %v750 = vunpack.c.l.b16 %v321
    %v751 = vunpack.c.l.b16 %v322
    %v752 = vunpack.c.h.b16 %v322
    %v753 = vunpack.c.l.b16 %v323
    %v754 = vunpack.c.l.b16 %v324
    %v755 = vunpack.c.h.b16 %v324
    %v756 = vunpack.c.l.b16 %v325
    %v757 = vunpack.c.l.b16 %v326
    %v758 = vunpack.c.h.b16 %v326
    %v759 = vunpack.c.l.b16 %v327
    %v760 = vunpack.c.l.b16 %v328
    %v761 = vunpack.c.h.b16 %v328
    %v762 = vunpack.c.l.b16 %v329
    %v763 = vunpack.c.l.b16 %v330
    %v764 = vunpack.c.h.b16 %v330
    %v765 = vunpack.c.l.b16 %v331
    %v766 = vunpack.c.l.b16 %v332
    %v767 = vunpack.c.h.b16 %v332
    %v768 = vunpack.c.l.b16 %v333
    %v769 = vpack.c.b16 %v580, %v577
    %v770 = vpack.c.b16 %v581, %v578
    %v771 = vpack.c.b16 %v582, %v579
    %v772 = vpack.c.b16 %v586, %v583
    %v773 = vpack.c.b16 %v587, %v584
    %v774 = vpack.c.b16 %v588, %v585
    %v775 = vpack.c.b16 %v592, %v589
    %v776 = vpack.c.b16 %v593, %v590
    %v777 = vpack.c.b16 %v594, %v591
    %v778 = vpack.c.b16 %v598, %v595
    %v779 = vpack.c.b16 %v599, %v596
    %v780 = vpack.c.b16 %v600, %v597
    %v781 = vpack.c.b16 %v604, %v601
    %v782 = vpack.c.b16 %v605, %v602
    %v783 = vpack.c.b16 %v606, %v603
    %v784 = vpack.c.b16 %v610, %v607
    %v785 = vpack.c.b16 %v611, %v608
    %v786 = vpack.c.b16 %v612, %v609
    %v787 = vpack.c.b16 %v616, %v613
    %v788 = vpack.c.b16 %v617, %v614
    %v789 = vpack.c.b16 %v618, %v615
    %v790 = vpack.c.b16 %v622, %v619
    %v791 = vpack.c.b16 %v623, %v620
    %v792 = vpack.c.b16 %v624, %v621
    %v793 = vpack.c.b16 %v628, %v625
    %v794 = vpack.c.b16 %v629, %v626
    %v795 = vpack.c.b16 %v630, %v627
    %v796 = vpack.c.b16 %v634, %v631
    %v797 = vpack.c.b16 %v635, %v632
    %v798 = vpack.c.b16 %v636, %v633
    %v799 = vpack.c.b16 %v640, %v637
    %v800 = vpack.c.b16 %v641, %v638
    %v801 = vpack.c.b16 %v642, %v639
    %v802 = vpack.c.b16 %v646, %v643
    %v803 = vpack.c.b16 %v647, %v644
    %v804 = vpack.c.b16 %v648, %v645
    %v805 = vpack.c.b16 %v652, %v649
    %v806 = vpack.c.b16 %v653, %v650
    %v807 = vpack.c.b16 %v654, %v651
    %v808 = vpack.c.b16 %v658, %v655
    %v809 = vpack.c.b16 %v659, %v656
    %v810 = vpack.c.b16 %v660, %v657
    %v811 = vpack.c.b16 %v664, %v661
    %v812 = vpack.c.b16 %v665, %v662
    %v813 = vpack.c.b16 %v666, %v663
    %v814 = vpack.c.b16 %v670, %v667
    %v815 = vpack.c.b16 %v671, %v668
    %v816 = vpack.c.b16 %v672, %v669
    %v817 = vpack.c.b16 %v676, %v673
    %v818 = vpack.c.b16 %v677, %v674
    %v819 = vpack.c.b16 %v678, %v675
    %v820 = vpack.c.b16 %v682, %v679
    %v821 = vpack.c.b16 %v683, %v680
    %v822 = vpack.c.b16 %v684, %v681
    %v823 = vpack.c.b16 %v688, %v685
    %v824 = vpack.c.b16 %v689, %v686
    %v825 = vpack.c.b16 %v690, %v687
    %v826 = vpack.c.b16 %v694, %v691
    %v827 = vpack.c.b16 %v695, %v692
    %v828 = vpack.c.b16 %v696, %v693
    %v829 = vpack.c.b16 %v700, %v697
    %v830 = vpack.c.b16 %v701, %v698
    %v831 = vpack.c.b16 %v702, %v699
    %v832 = vpack.c.b16 %v706, %v703
    %v833 = vpack.c.b16 %v707, %v704
    %v834 = vpack.c.b16 %v708, %v705
    %v835 = vpack.c.b16 %v712, %v709
    %v836 = vpack.c.b16 %v713, %v710
    %v837 = vpack.c.b16 %v714, %v711
    %v838 = vpack.c.b16 %v718, %v715
    %v839 = vpack.c.b16 %v719, %v716
    %v840 = vpack.c.b16 %v720, %v717
    %v841 = vpack.c.b16 %v724, %v721
    %v842 = vpack.c.b16 %v725, %v722
    %v843 = vpack.c.b16 %v726, %v723
    %v844 = vpack.c.b16 %v730, %v727
    %v845 = vpack.c.b16 %v731, %v728
    %v846 = vpack.c.b16 %v732, %v729
    %v847 = vpack.c.b16 %v736, %v733
    %v848 = vpack.c.b16 %v737, %v734
    %v849 = vpack.c.b16 %v738, %v735
    %v850 = vpack.c.b16 %v742, %v739
    %v851 = vpack.c.b16 %v743, %v740
    %v852 = vpack.c.b16 %v744, %v741
    %v853 = vpack.c.b16 %v748, %v745
    %v854 = vpack.c.b16 %v749, %v746
    %v855 = vpack.c.b16 %v750, %v747
    %v856 = vpack.c.b16 %v754, %v751
    %v857 = vpack.c.b16 %v755, %v752
    %v858 = vpack.c.b16 %v756, %v753
    %v859 = vpack.c.b16 %v760, %v757
    %v860 = vpack.c.b16 %v761, %v758
    %v861 = vpack.c.b16 %v762, %v759
    %v862 = vpack.c.b16 %v766, %v763
    %v863 = vpack.c.b16 %v767, %v764
    %v864 = vpack.c.b16 %v768, %v765
    %961 = vmatprep.subr.bf16.mxu0 %v770
    %962 = vmatpush1.bf16.msra.mxu0 %v769
    %963 = vmatprep.subr.bf16.mxu0 %v773
    %964 = vmatpush1.bf16.msra.mxu0 %v772
    %965 = vmatprep.subr.bf16.mxu0 %v776
    %966 = vmatpush1.bf16.msra.mxu0 %v775
    %967 = vmatprep.subr.bf16.mxu0 %v779
    %968 = vmatpush1.bf16.msra.mxu0 %v778
    %969 = vmatprep.subr.bf16.mxu0 %v782
    %970 = vmatpush1.bf16.msra.mxu0 %v781
    %971 = vmatprep.subr.bf16.mxu0 %v785
    %972 = vmatpush1.bf16.msra.mxu0 %v784
    %973 = vmatprep.subr.bf16.mxu0 %v788
    %974 = vmatpush1.bf16.msra.mxu0 %v787
    %975 = vmatprep.subr.bf16.mxu0 %v791
    %976 = vmatpush1.bf16.msra.mxu0 %v790
    %977 = vmatprep.subr.bf16.mxu0 %v794
    %978 = vmatpush1.bf16.msra.mxu0 %v793
    %979 = vmatprep.subr.bf16.mxu0 %v797
    %980 = vmatpush1.bf16.msra.mxu0 %v796
    %981 = vmatprep.subr.bf16.mxu0 %v800
    %982 = vmatpush1.bf16.msra.mxu0 %v799
    %983 = vmatprep.subr.bf16.mxu0 %v803
    %984 = vmatpush1.bf16.msra.mxu0 %v802
    %985 = vmatprep.subr.bf16.mxu0 %v806
    %986 = vmatpush1.bf16.msra.mxu0 %v805
    %987 = vmatprep.subr.bf16.mxu0 %v809
    %988 = vmatpush1.bf16.msra.mxu0 %v808
    %989 = vmatprep.subr.bf16.mxu0 %v812
    %990 = vmatpush1.bf16.msra.mxu0 %v811
    %991 = vmatprep.subr.bf16.mxu0 %v815
    %992 = vmatpush1.bf16.msra.mxu0 %v814
    %993 = vmatprep.mubr.bf16.mxu0 %v203
    %994 = vmatmul.mubr.bf16.gmra.mrb[0].mxu0 %v202
    %v995 = vpop.f32.mrb[0].mxu0
    %v996 = vadd.f32 %v403, %v995
    %v997 = vpop.f32.mrb[0].mxu0
    %v998 = vadd.f32 %v405, %v997
    %v999 = vpop.f32.mrb[0].mxu0
    %v1000 = vpop.f32.mrb[0].mxu0
    %1001 = vdwg.mxu0
    %1002 = vmatprep.subr.bf16.mxu0 %v818
    %1003 = vmatpush1.bf16.msra.mxu0 %v817
    %1004 = vmatprep.subr.bf16.mxu0 %v821
    %1005 = vmatpush1.bf16.msra.mxu0 %v820
    %1006 = vmatprep.subr.bf16.mxu0 %v824
    %1007 = vmatpush1.bf16.msra.mxu0 %v823
    %1008 = vmatprep.subr.bf16.mxu0 %v827
    %1009 = vmatpush1.bf16.msra.mxu0 %v826
    %1010 = vmatprep.subr.bf16.mxu0 %v830
    %1011 = vmatpush1.bf16.msra.mxu0 %v829
    %1012 = vmatprep.subr.bf16.mxu0 %v833
    %1013 = vmatpush1.bf16.msra.mxu0 %v832
    %1014 = vmatprep.subr.bf16.mxu0 %v836
    %1015 = vmatpush1.bf16.msra.mxu0 %v835
    %1016 = vmatprep.subr.bf16.mxu0 %v839
    %1017 = vmatpush1.bf16.msra.mxu0 %v838
    %1018 = vmatprep.subr.bf16.mxu0 %v842
    %1019 = vmatpush1.bf16.msra.mxu0 %v841
    %1020 = vmatprep.subr.bf16.mxu0 %v845
    %1021 = vmatpush1.bf16.msra.mxu0 %v844
    %1022 = vmatprep.subr.bf16.mxu0 %v848
    %1023 = vmatpush1.bf16.msra.mxu0 %v847
    %1024 = vmatprep.subr.bf16.mxu0 %v851
    %1025 = vmatpush1.bf16.msra.mxu0 %v850
    %1026 = vmatprep.subr.bf16.mxu0 %v854
    %1027 = vmatpush1.bf16.msra.mxu0 %v853
    %1028 = vmatprep.subr.bf16.mxu0 %v857
    %1029 = vmatpush1.bf16.msra.mxu0 %v856
    %1030 = vmatprep.subr.bf16.mxu0 %v860
    %1031 = vmatpush1.bf16.msra.mxu0 %v859
    %1032 = vmatprep.subr.bf16.mxu0 %v863
    %1033 = vmatpush1.bf16.msra.mxu0 %v862
    %1034 = vmatprep.mubr.bf16.mxu0 %v205
    %1035 = vmatmul.mubr.bf16.gmra.mrb[0].mxu0 %v204
    %v1036 = vpop.f32.mrb[0].mxu0
    %v1037 = vadd.f32 %v996, %v1036
    %v1038 = vpop.f32.mrb[0].mxu0
    %v1039 = vadd.f32 %v998, %v1038
    %v1040 = vpop.f32.mrb[0].mxu0
    %v1041 = vpop.f32.mrb[0].mxu0
    %1042 = vdwg.mxu0
    %1043 = vmatprep.subr.bf16.mxu0 0
    %1044 = vmatpush1.bf16.msra.mxu0 %v771
    %1045 = vmatprep.subr.bf16.mxu0 0
    %1046 = vmatpush1.bf16.msra.mxu0 %v774
    %1047 = vmatprep.subr.bf16.mxu0 0
    %1048 = vmatpush1.bf16.msra.mxu0 %v777
    %1049 = vmatprep.subr.bf16.mxu0 0
    %1050 = vmatpush1.bf16.msra.mxu0 %v780
    %1051 = vmatprep.subr.bf16.mxu0 0
    %1052 = vmatpush1.bf16.msra.mxu0 %v783
    %1053 = vmatprep.subr.bf16.mxu0 0
    %1054 = vmatpush1.bf16.msra.mxu0 %v786
    %1055 = vmatprep.subr.bf16.mxu0 0
    %1056 = vmatpush1.bf16.msra.mxu0 %v789
    %1057 = vmatprep.subr.bf16.mxu0 0
    %1058 = vmatpush1.bf16.msra.mxu0 %v792
    %1059 = vmatprep.subr.bf16.mxu0 0
    %1060 = vmatpush1.bf16.msra.mxu0 %v795
    %1061 = vmatprep.subr.bf16.mxu0 0
    %1062 = vmatpush1.bf16.msra.mxu0 %v798
    %1063 = vmatprep.subr.bf16.mxu0 0
    %1064 = vmatpush1.bf16.msra.mxu0 %v801
    %1065 = vmatprep.subr.bf16.mxu0 0
    %1066 = vmatpush1.bf16.msra.mxu0 %v804
    %1067 = vmatprep.subr.bf16.mxu0 0
    %1068 = vmatpush1.bf16.msra.mxu0 %v807
    %1069 = vmatprep.subr.bf16.mxu0 0
    %1070 = vmatpush1.bf16.msra.mxu0 %v810
    %1071 = vmatprep.subr.bf16.mxu0 0
    %1072 = vmatpush1.bf16.msra.mxu0 %v813
    %1073 = vmatprep.subr.bf16.mxu0 0
    %1074 = vmatpush1.bf16.msra.mxu0 %v816
    %1075 = vmatprep.mubr.bf16.mxu0 %v203
    %1076 = vmatmul.mubr.bf16.gmra.mrb[0].mxu0 %v202
    %v1077 = vpop.f32.mrb[0].mxu0
    %v1078 = vadd.f32 %v444, %v1077
    %v1079 = vpop.f32.mrb[0].mxu0
    %v1080 = vpop.f32.mrb[0].mxu0
    %v1081 = vpop.f32.mrb[0].mxu0
    %1082 = vdwg.mxu0
    %1083 = vmatprep.subr.bf16.mxu0 0
    %1084 = vmatpush1.bf16.msra.mxu0 %v819
    %1085 = vmatprep.subr.bf16.mxu0 0
    %1086 = vmatpush1.bf16.msra.mxu0 %v822
    %1087 = vmatprep.subr.bf16.mxu0 0
    %1088 = vmatpush1.bf16.msra.mxu0 %v825
    %1089 = vmatprep.subr.bf16.mxu0 0
    %1090 = vmatpush1.bf16.msra.mxu0 %v828
    %1091 = vmatprep.subr.bf16.mxu0 0
    %1092 = vmatpush1.bf16.msra.mxu0 %v831
    %1093 = vmatprep.subr.bf16.mxu0 0
    %1094 = vmatpush1.bf16.msra.mxu0 %v834
    %1095 = vmatprep.subr.bf16.mxu0 0
    %1096 = vmatpush1.bf16.msra.mxu0 %v837
    %1097 = vmatprep.subr.bf16.mxu0 0
    %1098 = vmatpush1.bf16.msra.mxu0 %v840
    %1099 = vmatprep.subr.bf16.mxu0 0
    %1100 = vmatpush1.bf16.msra.mxu0 %v843
    %1101 = vmatprep.subr.bf16.mxu0 0
    %1102 = vmatpush1.bf16.msra.mxu0 %v846
    %1103 = vmatprep.subr.bf16.mxu0 0
    %1104 = vmatpush1.bf16.msra.mxu0 %v849
    %1105 = vmatprep.subr.bf16.mxu0 0
    %1106 = vmatpush1.bf16.msra.mxu0 %v852
    %1107 = vmatprep.subr.bf16.mxu0 0
    %1108 = vmatpush1.bf16.msra.mxu0 %v855
    %1109 = vmatprep.subr.bf16.mxu0 0
    %1110 = vmatpush1.bf16.msra.mxu0 %v858
    %1111 = vmatprep.subr.bf16.mxu0 0
    %1112 = vmatpush1.bf16.msra.mxu0 %v861
    %1113 = vmatprep.subr.bf16.mxu0 0
    %1114 = vmatpush1.bf16.msra.mxu0 %v864
    %1115 = vmatprep.mubr.bf16.mxu0 %v205
    %1116 = vmatmul.mubr.bf16.gmra.mrb[0].mxu0 %v204
    %v1117 = vpop.f32.mrb[0].mxu0
    %v1118 = vadd.f32 %v1078, %v1117
    %v1119 = vpop.f32.mrb[0].mxu0
    %v1120 = vpop.f32.mrb[0].mxu0
    %v1121 = vpop.f32.mrb[0].mxu0
    %1122 = vdwg.mxu0
    %v1123 = vld [vmem:[%s6] sm:$0x7]
    %v1125 = vlaneseq
    %v1126 = vshrl.u32 %v1125, 7
    %v1127 = vsub.s32 0, %v1126
    %v1128 = vrot.slane %v1123, %v1127
    %v1129 = vlaneseq
    %v1130 = vshrl.u32 %v1129, 7
    %v1131 = vsub.s32 1, %v1130
    %v1132 = vrot.slane %v1123, %v1131
    %v1133 = vlaneseq
    %v1134 = vshrl.u32 %v1133, 7
    %v1135 = vsub.s32 2, %v1134
    %v1136 = vrot.slane %v1123, %v1135
    %v1140 = vadd.f32 %v1037, %v1128
    %v1141 = vadd.f32 %v1039, %v1132
    %v1142 = vadd.f32 %v1118, %v1136
    %v1143 = vmax.f32 %v1140, 0.0
    %v1144 = vmax.f32 %v1141, 0.0
    %v1145 = vmax.f32 %v1142, 0.0
    %v1146 = vld [vmem:[%s7] sm:$0x7]
    %v1148 = vlaneseq
    %v1149 = vshrl.u32 %v1148, 7
    %v1150 = vsub.s32 0, %v1149
    %v1151 = vrot.slane %v1146, %v1150
    %v1152 = vlaneseq
    %v1153 = vshrl.u32 %v1152, 7
    %v1154 = vsub.s32 1, %v1153
    %v1155 = vrot.slane %v1146, %v1154
    %v1156 = vlaneseq
    %v1157 = vshrl.u32 %v1156, 7
    %v1158 = vsub.s32 2, %v1157
    %v1159 = vrot.slane %v1146, %v1158
    %v1163 = vmul.f32 %v1143, %v1151
    %v1164 = vmul.f32 %v1144, %v1155
    %v1165 = vmul.f32 %v1145, %v1159
    %v1166 = vadd.f32 %v1163, %v1164
    %v1167 = vadd.f32 %v1166, %v1165
    %1168 = vadd.xlane.f32.xlu0 %v1167
    %v1169 = vpop.xlane.xlu0 %1168
    %v1170 = vld [vmem:[#allocation2] sm:$0x1]
    %1172 = vset.pattern.permute.xlu0 0
    %1173 = vperm.xlu0 %1172, %v1170
    %v1174 = vpop.permute.xlu0 %1173
    %v1176 = vlaneseq
    %v1177 = vshrl.u32 %v1176, 7
    %v1178 = vsub.s32 0, %v1177
    %v1179 = vrot.slane %v1174, %v1178
    %v1180 = vadd.f32 %v1169, %v1179
    %v1182 = vlaneseq
    %v1183 = vand.u32 %v1182, 127
    %v1184 = vlaneseq
    %v1185 = vshrl.u32 %v1184, 7
    %v1186 = vsub.s32 %v1183, %v1185
    %v1187 = vrot.slane %v1180, %v1186
    %vm1189 = vcmask 57344
    %1190 = vst.msk [vmem:[#allocation8] sm:$0x1] %vm1189, %v1187
    // Predicated region
    $region46: #{tpu_custom_call.1} parent=1 // pred_check
      _
    $region47: #{tpu_custom_call.1} parent=1 // pred_check_branch
      %1192 = sbr.rel (0) target = $region49
    $region48: #{tpu_custom_call.1} parent=1 // pred_region
      %s1194 = ssub.s32 16, 16
      %1195 = vsyncadd [#allocation5], %s1194
      %s1197 = sshll.u32 [#allocation8], 4
      %s1198 = int_to_ptr.vmem [resolvable:$true] %s1197
      %1200 = dma.vmem_to_hbm [thread:$0]  %s1198, 16, %s9, [#allocation5]
    $region49: #{tpu_custom_call.1} parent=1 // pred_fallthru
      _
    // Predicated region
    $region50: #{tpu_custom_call.1} parent=1 // pred_check
      _
    $region51: #{tpu_custom_call.1} parent=1 // pred_check_branch
      %1202 = sbr.rel (0) target = $region53
    $region52: #{tpu_custom_call.1} parent=1 // pred_region
      %1203 = dma.done [#allocation5], 16
    $region53: #{tpu_custom_call.1} parent=1 // pred_fallthru
      _
    %1204 = vsyncpa [#allocation4], 1
    %1205 = vsyncpa [#allocation7], 1
    %1206 = vsyncpa [#allocation5], 1

</llo_original>
